<compile_context>
chip_gen: v7x
topology: tpu7x:2x2x1
jax: 0.10.0
libtpu: 0.0.40
codegen_flags: <defaults>
</compile_context>

<pallas_src>
import jax
import jax.numpy as jnp
from jax.experimental import pallas as pl
from jax.experimental.pallas import tpu as pltpu

HIDDEN = 13
_LANES = 128
_MAX_TILE_ROWS = 512  # 512*128*4B = 256 KiB per buffer; double-buffered in+out ~= 1 MiB


def _mlp_kernel(params_ref, x_ref, out_ref):
    """Elementwise MLP tile: y = b2 + sum_j w2[j] * tanh(w1[j]*x + b1[j]).

    params_ref: SMEM f32[3*HIDDEN + 1] = [w1(13) | b1(13) | w2(13) | b2(1)]
    x_ref / out_ref: VMEM f32[tile_rows, 128] lane-dense tiles.
    """
    x = x_ref[...]                                        # (tile_rows, 128)
    acc = jnp.full_like(x, params_ref[3 * HIDDEN])        # broadcast b2
    # Unrolled hidden units: pure VPU (mul/add) + EUP (tanh); MXU untouched.
    for j in range(HIDDEN):
        w1j = params_ref[j]
        b1j = params_ref[HIDDEN + j]
        w2j = params_ref[2 * HIDDEN + j]
        acc = acc + w2j * jnp.tanh(x * w1j + b1j)
    out_ref[...] = acc


def subclass_model_forward(x, w1, b1, w2, b2):
    """x: (N, 1) float32 (torch Linear(1, ...) convention). Returns (N, 1) float32.

    Weights are stored pre-transposed as (in_features, out_features), matching
    y = x @ W + b of the original module's y = x @ W.T + b.
    """
    n = x.shape[0]

    # Pack the 40 parameters into one tiny SMEM-resident array (scalar reads in-kernel).
    params = jnp.concatenate(
        [w1.reshape(-1), b1.reshape(-1), w2.reshape(-1), b2.reshape(-1)]
    ).astype(jnp.float32)

    # Lane-dense view: pad N up to whole (tile_rows, 128) tiles.
    rows = pl.cdiv(n, _LANES)
    rows = ((rows + 7) // 8) * 8                          # sublane multiple of 8
    if rows <= _MAX_TILE_ROWS:
        tile_rows = rows
        grid_rows = 1
    else:
        tile_rows = _MAX_TILE_ROWS
        grid_rows = pl.cdiv(rows, _MAX_TILE_ROWS)
        rows = grid_rows * _MAX_TILE_ROWS
    n_pad = rows * _LANES

    x_flat = jnp.pad(x.reshape(-1).astype(jnp.float32), (0, n_pad - n))
    x2d = x_flat.reshape(rows, _LANES)

    out2d = pl.pallas_call(
        _mlp_kernel,
        out_shape=jax.ShapeDtypeStruct((rows, _LANES), jnp.float32),
        grid=(grid_rows,),
        in_specs=[
            pl.BlockSpec(memory_space=pltpu.MemorySpace.SMEM),        # packed params
            pl.BlockSpec((tile_rows, _LANES), lambda i: (i, 0)),      # x tile
        ],
        out_specs=pl.BlockSpec((tile_rows, _LANES), lambda i: (i, 0)),
        compiler_params=pltpu.CompilerParams(
            dimension_semantics=("parallel",),        # lets v7x's 2 TCs split the batch
            vmem_limit_bytes=32 * 1024 * 1024,
        ),
        cost_estimate=pl.CostEstimate(
            flops=4 * HIDDEN * n_pad,                 # ~4 flops per hidden unit per elem
            transcendentals=HIDDEN * n_pad,           # 13 tanh per elem
            bytes_accessed=2 * 4 * n_pad,             # read + write f32
        ),
    )(params, x2d)

    # Drop the zero padding (tanh of padding is finite, so no NaN/Inf leaks).
    return out2d.reshape(-1)[:n].reshape(n, 1)


def init_params(key):
    """Deterministic init mirroring torch.nn.Linear default U[-1/sqrt(fan_in), +...]."""
    k1, k2, k3, k4 = jax.random.split(key, 4)
    bound1 = 1.0 / jnp.sqrt(1.0)    # fan_in = 1
    bound2 = 1.0 / jnp.sqrt(13.0)   # fan_in = 13
    # Stored as (in, out) so the forward computes x @ W + b.
    w1 = jax.random.uniform(k1, (1, HIDDEN), jnp.float32, -bound1, bound1)
    b1 = jax.random.uniform(k2, (1, HIDDEN), jnp.float32, -bound1, bound1)
    w2 = jax.random.uniform(k3, (HIDDEN, 1), jnp.float32, -bound2, bound2)
    b2 = jax.random.uniform(k4, (1, 1), jnp.float32, -bound2, bound2)
    return w1, b1, w2, b2


if __name__ == "__main__":
    key = jax.random.PRNGKey(0)
    pkey, xkey = jax.random.split(key)
    w1, b1, w2, b2 = init_params(pkey)

    # Small demo batch of scalar inputs, matching Linear(1, ...) input shape (N, 1).
    x_small = jax.random.normal(xkey, (8, 1), jnp.float32)
    out_small = jax.block_until_ready(subclass_model_forward(x_small, w1, b1, w2, b2))
    ref_small = jnp.tanh(x_small @ w1 + b1) @ w2 + b2
    assert out_small.shape == (8, 1)
    assert jnp.allclose(out_small, ref_small, atol=1e-5, rtol=1e-5)

    # Larger batch to exercise the multi-tile parallel grid + padding/un-padding path.
    x_big = jax.random.normal(jax.random.PRNGKey(1), (70_000, 1), jnp.float32)
    out_big = jax.block_until_ready(subclass_model_forward(x_big, w1, b1, w2, b2))
    ref_big = jnp.tanh(x_big @ w1 + b1) @ w2 + b2
    assert out_big.shape == (70_000, 1)
    assert jnp.allclose(out_big, ref_big, atol=1e-5, rtol=1e-5)

    print("KERNEL_OK")
</pallas_src>

<mosaic_0001>
module attributes {stable_mosaic.version = 11 : i64} {
  func.func @_mlp_kernel(%arg0: i32, %arg1: memref<40xf32, #tpu.memory_space<smem>>, %arg2: memref<8x128xf32, #tpu.memory_space<vmem>>, %arg3: memref<8x128xf32, #tpu.memory_space<vmem>>) attributes {dimension_semantics = [#tpu.dimension_semantics<parallel>], iteration_bounds = array<i64: 1>, scalar_prefetch = 0 : i64, scratch_operands = 0 : i64, tpu.core_type = #tpu.core_type<tc>, window_params = [{transform_indices = @transform_0, window_bounds = array<i64: 40>}, {transform_indices = @transform_1, window_bounds = array<i64: 8, 128>}, {transform_indices = @transform_2, window_bounds = array<i64: 8, 128>}]} {
    %c0 = arith.constant 0 : index
    %c0_0 = arith.constant 0 : index
    %0 = vector.load %arg2[%c0, %c0_0] : memref<8x128xf32, #tpu.memory_space<vmem>>, vector<8x128xf32>
    %c39 = arith.constant 39 : index
    %1 = memref.load %arg1[%c39] : memref<40xf32, #tpu.memory_space<smem>>
    %2 = vector.broadcast %1 : f32 to vector<8x128xf32>
    %c0_1 = arith.constant 0 : index
    %3 = memref.load %arg1[%c0_1] : memref<40xf32, #tpu.memory_space<smem>>
    %c13 = arith.constant 13 : index
    %4 = memref.load %arg1[%c13] : memref<40xf32, #tpu.memory_space<smem>>
    %c26 = arith.constant 26 : index
    %5 = memref.load %arg1[%c26] : memref<40xf32, #tpu.memory_space<smem>>
    %6 = vector.broadcast %3 : f32 to vector<8x128xf32>
    %7 = arith.mulf %0, %6 : vector<8x128xf32>
    %8 = vector.broadcast %4 : f32 to vector<8x128xf32>
    %9 = arith.addf %7, %8 : vector<8x128xf32>
    %10 = math.tanh %9 : vector<8x128xf32>
    %11 = vector.broadcast %5 : f32 to vector<8x128xf32>
    %12 = arith.mulf %11, %10 : vector<8x128xf32>
    %13 = arith.addf %2, %12 : vector<8x128xf32>
    %c1 = arith.constant 1 : index
    %14 = memref.load %arg1[%c1] : memref<40xf32, #tpu.memory_space<smem>>
    %c14 = arith.constant 14 : index
    %15 = memref.load %arg1[%c14] : memref<40xf32, #tpu.memory_space<smem>>
    %c27 = arith.constant 27 : index
    %16 = memref.load %arg1[%c27] : memref<40xf32, #tpu.memory_space<smem>>
    %17 = vector.broadcast %14 : f32 to vector<8x128xf32>
    %18 = arith.mulf %0, %17 : vector<8x128xf32>
    %19 = vector.broadcast %15 : f32 to vector<8x128xf32>
    %20 = arith.addf %18, %19 : vector<8x128xf32>
    %21 = math.tanh %20 : vector<8x128xf32>
    %22 = vector.broadcast %16 : f32 to vector<8x128xf32>
    %23 = arith.mulf %22, %21 : vector<8x128xf32>
    %24 = arith.addf %13, %23 : vector<8x128xf32>
    %c2 = arith.constant 2 : index
    %25 = memref.load %arg1[%c2] : memref<40xf32, #tpu.memory_space<smem>>
    %c15 = arith.constant 15 : index
    %26 = memref.load %arg1[%c15] : memref<40xf32, #tpu.memory_space<smem>>
    %c28 = arith.constant 28 : index
    %27 = memref.load %arg1[%c28] : memref<40xf32, #tpu.memory_space<smem>>
    %28 = vector.broadcast %25 : f32 to vector<8x128xf32>
    %29 = arith.mulf %0, %28 : vector<8x128xf32>
    %30 = vector.broadcast %26 : f32 to vector<8x128xf32>
    %31 = arith.addf %29, %30 : vector<8x128xf32>
    %32 = math.tanh %31 : vector<8x128xf32>
    %33 = vector.broadcast %27 : f32 to vector<8x128xf32>
    %34 = arith.mulf %33, %32 : vector<8x128xf32>
    %35 = arith.addf %24, %34 : vector<8x128xf32>
    %c3 = arith.constant 3 : index
    %36 = memref.load %arg1[%c3] : memref<40xf32, #tpu.memory_space<smem>>
    %c16 = arith.constant 16 : index
    %37 = memref.load %arg1[%c16] : memref<40xf32, #tpu.memory_space<smem>>
    %c29 = arith.constant 29 : index
    %38 = memref.load %arg1[%c29] : memref<40xf32, #tpu.memory_space<smem>>
    %39 = vector.broadcast %36 : f32 to vector<8x128xf32>
    %40 = arith.mulf %0, %39 : vector<8x128xf32>
    %41 = vector.broadcast %37 : f32 to vector<8x128xf32>
    %42 = arith.addf %40, %41 : vector<8x128xf32>
    %43 = math.tanh %42 : vector<8x128xf32>
    %44 = vector.broadcast %38 : f32 to vector<8x128xf32>
    %45 = arith.mulf %44, %43 : vector<8x128xf32>
    %46 = arith.addf %35, %45 : vector<8x128xf32>
    %c4 = arith.constant 4 : index
    %47 = memref.load %arg1[%c4] : memref<40xf32, #tpu.memory_space<smem>>
    %c17 = arith.constant 17 : index
    %48 = memref.load %arg1[%c17] : memref<40xf32, #tpu.memory_space<smem>>
    %c30 = arith.constant 30 : index
    %49 = memref.load %arg1[%c30] : memref<40xf32, #tpu.memory_space<smem>>
    %50 = vector.broadcast %47 : f32 to vector<8x128xf32>
    %51 = arith.mulf %0, %50 : vector<8x128xf32>
    %52 = vector.broadcast %48 : f32 to vector<8x128xf32>
    %53 = arith.addf %51, %52 : vector<8x128xf32>
    %54 = math.tanh %53 : vector<8x128xf32>
    %55 = vector.broadcast %49 : f32 to vector<8x128xf32>
    %56 = arith.mulf %55, %54 : vector<8x128xf32>
    %57 = arith.addf %46, %56 : vector<8x128xf32>
    %c5 = arith.constant 5 : index
    %58 = memref.load %arg1[%c5] : memref<40xf32, #tpu.memory_space<smem>>
    %c18 = arith.constant 18 : index
    %59 = memref.load %arg1[%c18] : memref<40xf32, #tpu.memory_space<smem>>
    %c31 = arith.constant 31 : index
    %60 = memref.load %arg1[%c31] : memref<40xf32, #tpu.memory_space<smem>>
    %61 = vector.broadcast %58 : f32 to vector<8x128xf32>
    %62 = arith.mulf %0, %61 : vector<8x128xf32>
    %63 = vector.broadcast %59 : f32 to vector<8x128xf32>
    %64 = arith.addf %62, %63 : vector<8x128xf32>
    %65 = math.tanh %64 : vector<8x128xf32>
    %66 = vector.broadcast %60 : f32 to vector<8x128xf32>
    %67 = arith.mulf %66, %65 : vector<8x128xf32>
    %68 = arith.addf %57, %67 : vector<8x128xf32>
    %c6 = arith.constant 6 : index
    %69 = memref.load %arg1[%c6] : memref<40xf32, #tpu.memory_space<smem>>
    %c19 = arith.constant 19 : index
    %70 = memref.load %arg1[%c19] : memref<40xf32, #tpu.memory_space<smem>>
    %c32 = arith.constant 32 : index
    %71 = memref.load %arg1[%c32] : memref<40xf32, #tpu.memory_space<smem>>
    %72 = vector.broadcast %69 : f32 to vector<8x128xf32>
    %73 = arith.mulf %0, %72 : vector<8x128xf32>
    %74 = vector.broadcast %70 : f32 to vector<8x128xf32>
    %75 = arith.addf %73, %74 : vector<8x128xf32>
    %76 = math.tanh %75 : vector<8x128xf32>
    %77 = vector.broadcast %71 : f32 to vector<8x128xf32>
    %78 = arith.mulf %77, %76 : vector<8x128xf32>
    %79 = arith.addf %68, %78 : vector<8x128xf32>
    %c7 = arith.constant 7 : index
    %80 = memref.load %arg1[%c7] : memref<40xf32, #tpu.memory_space<smem>>
    %c20 = arith.constant 20 : index
    %81 = memref.load %arg1[%c20] : memref<40xf32, #tpu.memory_space<smem>>
    %c33 = arith.constant 33 : index
    %82 = memref.load %arg1[%c33] : memref<40xf32, #tpu.memory_space<smem>>
    %83 = vector.broadcast %80 : f32 to vector<8x128xf32>
    %84 = arith.mulf %0, %83 : vector<8x128xf32>
    %85 = vector.broadcast %81 : f32 to vector<8x128xf32>
    %86 = arith.addf %84, %85 : vector<8x128xf32>
    %87 = math.tanh %86 : vector<8x128xf32>
    %88 = vector.broadcast %82 : f32 to vector<8x128xf32>
    %89 = arith.mulf %88, %87 : vector<8x128xf32>
    %90 = arith.addf %79, %89 : vector<8x128xf32>
    %c8 = arith.constant 8 : index
    %91 = memref.load %arg1[%c8] : memref<40xf32, #tpu.memory_space<smem>>
    %c21 = arith.constant 21 : index
    %92 = memref.load %arg1[%c21] : memref<40xf32, #tpu.memory_space<smem>>
    %c34 = arith.constant 34 : index
    %93 = memref.load %arg1[%c34] : memref<40xf32, #tpu.memory_space<smem>>
    %94 = vector.broadcast %91 : f32 to vector<8x128xf32>
    %95 = arith.mulf %0, %94 : vector<8x128xf32>
    %96 = vector.broadcast %92 : f32 to vector<8x128xf32>
    %97 = arith.addf %95, %96 : vector<8x128xf32>
    %98 = math.tanh %97 : vector<8x128xf32>
    %99 = vector.broadcast %93 : f32 to vector<8x128xf32>
    %100 = arith.mulf %99, %98 : vector<8x128xf32>
    %101 = arith.addf %90, %100 : vector<8x128xf32>
    %c9 = arith.constant 9 : index
    %102 = memref.load %arg1[%c9] : memref<40xf32, #tpu.memory_space<smem>>
    %c22 = arith.constant 22 : index
    %103 = memref.load %arg1[%c22] : memref<40xf32, #tpu.memory_space<smem>>
    %c35 = arith.constant 35 : index
    %104 = memref.load %arg1[%c35] : memref<40xf32, #tpu.memory_space<smem>>
    %105 = vector.broadcast %102 : f32 to vector<8x128xf32>
    %106 = arith.mulf %0, %105 : vector<8x128xf32>
    %107 = vector.broadcast %103 : f32 to vector<8x128xf32>
    %108 = arith.addf %106, %107 : vector<8x128xf32>
    %109 = math.tanh %108 : vector<8x128xf32>
    %110 = vector.broadcast %104 : f32 to vector<8x128xf32>
    %111 = arith.mulf %110, %109 : vector<8x128xf32>
    %112 = arith.addf %101, %111 : vector<8x128xf32>
    %c10 = arith.constant 10 : index
    %113 = memref.load %arg1[%c10] : memref<40xf32, #tpu.memory_space<smem>>
    %c23 = arith.constant 23 : index
    %114 = memref.load %arg1[%c23] : memref<40xf32, #tpu.memory_space<smem>>
    %c36 = arith.constant 36 : index
    %115 = memref.load %arg1[%c36] : memref<40xf32, #tpu.memory_space<smem>>
    %116 = vector.broadcast %113 : f32 to vector<8x128xf32>
    %117 = arith.mulf %0, %116 : vector<8x128xf32>
    %118 = vector.broadcast %114 : f32 to vector<8x128xf32>
    %119 = arith.addf %117, %118 : vector<8x128xf32>
    %120 = math.tanh %119 : vector<8x128xf32>
    %121 = vector.broadcast %115 : f32 to vector<8x128xf32>
    %122 = arith.mulf %121, %120 : vector<8x128xf32>
    %123 = arith.addf %112, %122 : vector<8x128xf32>
    %c11 = arith.constant 11 : index
    %124 = memref.load %arg1[%c11] : memref<40xf32, #tpu.memory_space<smem>>
    %c24 = arith.constant 24 : index
    %125 = memref.load %arg1[%c24] : memref<40xf32, #tpu.memory_space<smem>>
    %c37 = arith.constant 37 : index
    %126 = memref.load %arg1[%c37] : memref<40xf32, #tpu.memory_space<smem>>
    %127 = vector.broadcast %124 : f32 to vector<8x128xf32>
    %128 = arith.mulf %0, %127 : vector<8x128xf32>
    %129 = vector.broadcast %125 : f32 to vector<8x128xf32>
    %130 = arith.addf %128, %129 : vector<8x128xf32>
    %131 = math.tanh %130 : vector<8x128xf32>
    %132 = vector.broadcast %126 : f32 to vector<8x128xf32>
    %133 = arith.mulf %132, %131 : vector<8x128xf32>
    %134 = arith.addf %123, %133 : vector<8x128xf32>
    %c12 = arith.constant 12 : index
    %135 = memref.load %arg1[%c12] : memref<40xf32, #tpu.memory_space<smem>>
    %c25 = arith.constant 25 : index
    %136 = memref.load %arg1[%c25] : memref<40xf32, #tpu.memory_space<smem>>
    %c38 = arith.constant 38 : index
    %137 = memref.load %arg1[%c38] : memref<40xf32, #tpu.memory_space<smem>>
    %138 = vector.broadcast %135 : f32 to vector<8x128xf32>
    %139 = arith.mulf %0, %138 : vector<8x128xf32>
    %140 = vector.broadcast %136 : f32 to vector<8x128xf32>
    %141 = arith.addf %139, %140 : vector<8x128xf32>
    %142 = math.tanh %141 : vector<8x128xf32>
    %143 = vector.broadcast %137 : f32 to vector<8x128xf32>
    %144 = arith.mulf %143, %142 : vector<8x128xf32>
    %145 = arith.addf %134, %144 : vector<8x128xf32>
    %c0_2 = arith.constant 0 : index
    %c0_3 = arith.constant 0 : index
    %146 = vector.load %arg3[%c0_2, %c0_3] : memref<8x128xf32, #tpu.memory_space<vmem>>, vector<8x128xf32>
    tpu.vector_store %arg3[%c0_2, %c0_3], %145 {strides = array<i32>} : memref<8x128xf32, #tpu.memory_space<vmem>>, vector<8x128xf32>,
    return
  }
  func.func @transform_0(%arg0: i32) -> i32 {
    %c0_i32 = arith.constant 0 : i32
    %c0_i32_0 = arith.constant 0 : i32
    return %c0_i32 : i32
  }
  func.func @transform_1(%arg0: i32) -> (i32, i32) {
    %c0_i32 = arith.constant 0 : i32
    %c0_i32_0 = arith.constant 0 : i32
    return %arg0, %c0_i32 : i32, i32
  }
  func.func @transform_2(%arg0: i32) -> (i32, i32) {
    %c0_i32 = arith.constant 0 : i32
    %c0_i32_0 = arith.constant 0 : i32
    return %arg0, %c0_i32 : i32, i32
  }
}

</mosaic_0001>

<llo_original>
// kernel: tpu_custom_call.1
$region0: #{tpu_custom_call.1}
  #allocation0 [shape = 'u32[]', space=smem, size = 0x4, offset = 0x4, fixed_abs, tag = 'smem constant byte address 0x4 - core index']
  #allocation1 [shape = 'u32[144,128]{1,0:T(1,128)}', space=vmem, size = 0x12000, scoped, tag = 'internal scratch']
  %s0 = inlined_call_operand.hbm [shape: f32[40], index: 0, kind: input, shape index: {}]
  %s1 = inlined_call_operand.hbm [shape: f32[8,128], index: 1, kind: input, shape index: {}]
  %s2 = inlined_call_operand.hbm [shape: f32[8,128], index: 2, kind: output, shape index: {}]
  %s3 = sld [smem:[#allocation0]]
  $region26: #{tpu_custom_call.1} parent=0
    _
  %s5 = ssub.s32 1, %s3
  %s6 = scalar_select 0, %s5, %s3
  $region1: #{tpu_custom_call.1} parent=0
    #allocation2 [shape = 'u8[512]{0}', space=smem, size = 0x200, scoped, tag = 'input window, operand 0, single buffered']
    #allocation3 [shape = 's32[1]{0}', space=sflag, size = 0x4, scoped, tag = 'scoped memory for tpu_custom_call.1']
    #allocation4 [shape = 's32[1]{0}', space=sflag, size = 0x4, scoped, tag = 'scoped memory for tpu_custom_call.1']
    #allocation5 [shape = 's32[1]{0}', space=sflag, size = 0x4, scoped, tag = 'scoped memory for tpu_custom_call.1']
    #allocation6 [shape = 'u8[4096]{0}', space=vmem, size = 0x1000, scoped, tag = 'input window, operand 1, single buffered']
    #allocation7 [shape = 'u8[4096]{0}', space=vmem, size = 0x1000, scoped, tag = 'output window, operand 0, single buffered']
    %7 = vsyncpa [#allocation5], 0
    %8 = vsyncpa [#allocation3], 0
    %9 = vsyncpa [#allocation4], 0
    // Predicated region
    $region2: #{tpu_custom_call.1} parent=1 // pred_check
      _
    $region3: #{tpu_custom_call.1} parent=1 // pred_check_branch
      %11 = sbr.rel (0) target = $region5
    $region4: #{tpu_custom_call.1} parent=1 // pred_region
      %s13 = ssub.s32 16, 16
      %14 = vsyncadd [#allocation5], %s13
      %17 = dma.hbm_to_smem %s0, 16, [#allocation2], [#allocation5]
    $region5: #{tpu_custom_call.1} parent=1 // pred_fallthru
      _
    // Predicated region
    $region6: #{tpu_custom_call.1} parent=1 // pred_check
      _
    $region7: #{tpu_custom_call.1} parent=1 // pred_check_branch
      %19 = sbr.rel (0) target = $region9
    $region8: #{tpu_custom_call.1} parent=1 // pred_region
      %s21 = ssub.s32 128, 128
      %22 = vsyncadd [#allocation3], %s21
      %s24 = sshll.u32 [#allocation6], 4
      %s25 = int_to_ptr.vmem [resolvable:$true] %s24
      %27 = dma.hbm_to_vmem [thread:$0]  %s1, 128, %s25, [#allocation3]
    $region9: #{tpu_custom_call.1} parent=1 // pred_fallthru
      _
    // Predicated region
    $region10: #{tpu_custom_call.1} parent=1 // pred_check
      _
    $region11: #{tpu_custom_call.1} parent=1 // pred_check_branch
      %29 = sbr.rel (0) target = $region13
    $region12: #{tpu_custom_call.1} parent=1 // pred_region
      %30 = dma.done [#allocation5], 16
    $region13: #{tpu_custom_call.1} parent=1 // pred_fallthru
      _
    // Predicated region
    $region14: #{tpu_custom_call.1} parent=1 // pred_check
      _
    $region15: #{tpu_custom_call.1} parent=1 // pred_check_branch
      %32 = sbr.rel (0) target = $region17
    $region16: #{tpu_custom_call.1} parent=1 // pred_region
      %33 = dma.done [#allocation3], 128
    $region17: #{tpu_custom_call.1} parent=1 // pred_fallthru
      _
    %34 = sfence
    %v35 = vld [vmem:[#allocation6] sm:$0xff]
    %s36 = sld [smem:[#allocation2 + $0x27]]
    %v37 = vstv %s36
    %s38 = sld [smem:[#allocation2]]
    %s39 = sld [smem:[#allocation2 + $0xd]]
    %s40 = sld [smem:[#allocation2 + $0x1a]]
    %v41 = vstv %s38
    %v42 = vmul.f32 %v35, %v41
    %v43 = vstv %s39
    %v44 = vadd.f32 %v42, %v43
    %v45 = vtanh.pop %v44
    %v46 = vstv %s40
    %v47 = vmul.f32 %v46, %v45
    %v48 = vadd.f32 %v37, %v47
    %s49 = sld [smem:[#allocation2 + $0x1]]
    %s50 = sld [smem:[#allocation2 + $0xe]]
    %s51 = sld [smem:[#allocation2 + $0x1b]]
    %v52 = vstv %s49
    %v53 = vmul.f32 %v35, %v52
    %v54 = vstv %s50
    %v55 = vadd.f32 %v53, %v54
    %v56 = vtanh.pop %v55
    %v57 = vstv %s51
    %v58 = vmul.f32 %v57, %v56
    %v59 = vadd.f32 %v48, %v58
    %s60 = sld [smem:[#allocation2 + $0x2]]
    %s61 = sld [smem:[#allocation2 + $0xf]]
    %s62 = sld [smem:[#allocation2 + $0x1c]]
    %v63 = vstv %s60
    %v64 = vmul.f32 %v35, %v63
    %v65 = vstv %s61
    %v66 = vadd.f32 %v64, %v65
    %v67 = vtanh.pop %v66
    %v68 = vstv %s62
    %v69 = vmul.f32 %v68, %v67
    %v70 = vadd.f32 %v59, %v69
    %s71 = sld [smem:[#allocation2 + $0x3]]
    %s72 = sld [smem:[#allocation2 + $0x10]]
    %s73 = sld [smem:[#allocation2 + $0x1d]]
    %v74 = vstv %s71
    %v75 = vmul.f32 %v35, %v74
    %v76 = vstv %s72
    %v77 = vadd.f32 %v75, %v76
    %v78 = vtanh.pop %v77
    %v79 = vstv %s73
    %v80 = vmul.f32 %v79, %v78
    %v81 = vadd.f32 %v70, %v80
    %s82 = sld [smem:[#allocation2 + $0x4]]
    %s83 = sld [smem:[#allocation2 + $0x11]]
    %s84 = sld [smem:[#allocation2 + $0x1e]]
    %v85 = vstv %s82
    %v86 = vmul.f32 %v35, %v85
    %v87 = vstv %s83
    %v88 = vadd.f32 %v86, %v87
    %v89 = vtanh.pop %v88
    %v90 = vstv %s84
    %v91 = vmul.f32 %v90, %v89
    %v92 = vadd.f32 %v81, %v91
    %s93 = sld [smem:[#allocation2 + $0x5]]
    %s94 = sld [smem:[#allocation2 + $0x12]]
    %s95 = sld [smem:[#allocation2 + $0x1f]]
    %v96 = vstv %s93
    %v97 = vmul.f32 %v35, %v96
    %v98 = vstv %s94
    %v99 = vadd.f32 %v97, %v98
    %v100 = vtanh.pop %v99
    %v101 = vstv %s95
    %v102 = vmul.f32 %v101, %v100
    %v103 = vadd.f32 %v92, %v102
    %s104 = sld [smem:[#allocation2 + $0x6]]
    %s105 = sld [smem:[#allocation2 + $0x13]]
    %s106 = sld [smem:[#allocation2 + $0x20]]
    %v107 = vstv %s104
    %v108 = vmul.f32 %v35, %v107
    %v109 = vstv %s105
    %v110 = vadd.f32 %v108, %v109
    %v111 = vtanh.pop %v110
    %v112 = vstv %s106
    %v113 = vmul.f32 %v112, %v111
    %v114 = vadd.f32 %v103, %v113
    %s115 = sld [smem:[#allocation2 + $0x7]]
    %s116 = sld [smem:[#allocation2 + $0x14]]
    %s117 = sld [smem:[#allocation2 + $0x21]]
    %v118 = vstv %s115
    %v119 = vmul.f32 %v35, %v118
    %v120 = vstv %s116
    %v121 = vadd.f32 %v119, %v120
    %v122 = vtanh.pop %v121
    %v123 = vstv %s117
    %v124 = vmul.f32 %v123, %v122
    %v125 = vadd.f32 %v114, %v124
    %s126 = sld [smem:[#allocation2 + $0x8]]
    %s127 = sld [smem:[#allocation2 + $0x15]]
    %s128 = sld [smem:[#allocation2 + $0x22]]
    %v129 = vstv %s126
    %v130 = vmul.f32 %v35, %v129
    %v131 = vstv %s127
    %v132 = vadd.f32 %v130, %v131
    %v133 = vtanh.pop %v132
    %v134 = vstv %s128
    %v135 = vmul.f32 %v134, %v133
    %v136 = vadd.f32 %v125, %v135
    %s137 = sld [smem:[#allocation2 + $0x9]]
    %s138 = sld [smem:[#allocation2 + $0x16]]
    %s139 = sld [smem:[#allocation2 + $0x23]]
    %v140 = vstv %s137
    %v141 = vmul.f32 %v35, %v140
    %v142 = vstv %s138
    %v143 = vadd.f32 %v141, %v142
    %v144 = vtanh.pop %v143
    %v145 = vstv %s139
    %v146 = vmul.f32 %v145, %v144
    %v147 = vadd.f32 %v136, %v146
    %s148 = sld [smem:[#allocation2 + $0xa]]
    %s149 = sld [smem:[#allocation2 + $0x17]]
    %s150 = sld [smem:[#allocation2 + $0x24]]
    %v151 = vstv %s148
    %v152 = vmul.f32 %v35, %v151
    %v153 = vstv %s149
    %v154 = vadd.f32 %v152, %v153
    %v155 = vtanh.pop %v154
    %v156 = vstv %s150
    %v157 = vmul.f32 %v156, %v155
    %v158 = vadd.f32 %v147, %v157
    %s159 = sld [smem:[#allocation2 + $0xb]]
    %s160 = sld [smem:[#allocation2 + $0x18]]
    %s161 = sld [smem:[#allocation2 + $0x25]]
    %v162 = vstv %s159
    %v163 = vmul.f32 %v35, %v162
    %v164 = vstv %s160
    %v165 = vadd.f32 %v163, %v164
    %v166 = vtanh.pop %v165
    %v167 = vstv %s161
    %v168 = vmul.f32 %v167, %v166
    %v169 = vadd.f32 %v158, %v168
    %s170 = sld [smem:[#allocation2 + $0xc]]
    %s171 = sld [smem:[#allocation2 + $0x19]]
    %s172 = sld [smem:[#allocation2 + $0x26]]
    %v173 = vstv %s170
    %v174 = vmul.f32 %v35, %v173
    %v175 = vstv %s171
    %v176 = vadd.f32 %v174, %v175
    %v177 = vtanh.pop %v176
    %v178 = vstv %s172
    %v179 = vmul.f32 %v178, %v177
    %v180 = vadd.f32 %v169, %v179
    %181 = vst [vmem:[#allocation7] sm:$0xff] %v180
    // Predicated region
    $region18: #{tpu_custom_call.1} parent=1 // pred_check
      _
    $region19: #{tpu_custom_call.1} parent=1 // pred_check_branch
      %183 = sbr.rel (0) target = $region21
    $region20: #{tpu_custom_call.1} parent=1 // pred_region
      %s185 = ssub.s32 128, 128
      %186 = vsyncadd [#allocation4], %s185
      %s188 = sshll.u32 [#allocation7], 4
      %s189 = int_to_ptr.vmem [resolvable:$true] %s188
      %191 = dma.vmem_to_hbm [thread:$0]  %s189, 128, %s2, [#allocation4]
    $region21: #{tpu_custom_call.1} parent=1 // pred_fallthru
      _
    // Predicated region
    $region22: #{tpu_custom_call.1} parent=1 // pred_check
      _
    $region23: #{tpu_custom_call.1} parent=1 // pred_check_branch
      %193 = sbr.rel (0) target = $region25
    $region24: #{tpu_custom_call.1} parent=1 // pred_region
      %194 = dma.done [#allocation4], 128
    $region25: #{tpu_custom_call.1} parent=1 // pred_fallthru
      _
    %195 = vsyncpa [#allocation3], 1
    %196 = vsyncpa [#allocation4], 1
    %197 = vsyncpa [#allocation5], 1

</llo_original>
